<compile_context>
chip_gen: v6e
topology: v6e:2x2x1
jax: 0.10.0
libtpu: 0.0.40
codegen_flags: <defaults>
</compile_context>

<pallas_src>
import functools

import jax
import jax.numpy as jnp
from jax.experimental import pallas as pl
from jax.experimental.pallas import tpu as pltpu

_LANES = 128


def _postproc_kernel(x_ref, w_ref, out_ref, sig_ref, *, precision):
    # x_ref: (C_in, T_hw), w_ref: (C_out, C_in), out_ref/sig_ref: (C_out, T_hw)
    # TODO(synk): for bit-exact f32 parity with PyTorch's conv pass
    # precision=jax.lax.Precision.HIGHEST (HIGH on v7x); the kernel is
    # HBM-read bound so the extra MXU passes stay hidden on v5e/v6e.
    o = jnp.dot(w_ref[...], x_ref[...],
                preferred_element_type=jnp.float32, precision=precision)
    out_ref[...] = o.astype(out_ref.dtype)
    sig_ref[...] = jax.nn.sigmoid(o).astype(sig_ref.dtype)


def _pick_hw_tile(hw, n_batch, itemsize, c_in, *,
                  max_tile=4096, x_block_budget_bytes=6 << 20):
    """Largest lane-multiple spatial tile whose x block fits the VMEM budget.

    ~6 MiB per x block -> 2048 lanes for f32, 4096 for bf16 (C_in=768), which
    keeps double-buffered VMEM ~13 MiB: inside every generation's scoped limit
    once vmem_limit_bytes=32 MiB is set, and well under v7x's 64 MiB physical.
    """
    budget_tile = (x_block_budget_bytes // (c_in * itemsize)) // _LANES * _LANES
    t = max(_LANES, min(max_tile, budget_tile))
    hw_lanes = pl.cdiv(hw, _LANES) * _LANES   # spatial extent rounded to lanes
    t = min(t, hw_lanes)                      # never bigger than needed
    # Megacore: v7x has 2 TensorCores; make sure there are >= 2 parallel grid
    # steps whenever the problem is splittable, so neither core idles.
    if n_batch * pl.cdiv(hw, t) < 2 and hw_lanes > _LANES:
        t = pl.cdiv(pl.cdiv(hw, _LANES), 2) * _LANES
    return t


def post_processing_standard(x_nchw, conv_weight, *, out_dtype=None,
                             precision=None):
    """
    x_nchw:      (N, 768, H, W)  float32 or bfloat16  -- PyTorch NCHW input
    conv_weight: (num_classes, 768, 1, 1)             -- PyTorch Conv2d weight
    returns (out, sigmoid(out)), each (N, num_classes, H, W), like the module.
    """
    N, C_in, H, W = x_nchw.shape
    C_out = conv_weight.shape[0]
    HW = H * W
    if out_dtype is None:
        out_dtype = x_nchw.dtype

    # Glue (reshape only, no transpose / no padding): NCHW -> (N, C_in, H*W).
    x_flat = x_nchw.reshape(N, C_in, HW)
    w = conv_weight.reshape(C_out, C_in)

    t_hw = _pick_hw_tile(HW, N, jnp.dtype(x_nchw.dtype).itemsize, C_in)
    grid = (N, pl.cdiv(HW, t_hw))   # last spatial block may be partial (masked)

    kernel = functools.partial(_postproc_kernel, precision=precision)

    out_flat, sig_flat = pl.pallas_call(
        kernel,
        out_shape=(
            jax.ShapeDtypeStruct((N, C_out, HW), out_dtype),
            jax.ShapeDtypeStruct((N, C_out, HW), out_dtype),
        ),
        grid_spec=pltpu.PrefetchScalarGridSpec(
            num_scalar_prefetch=0,
            grid=grid,
            in_specs=[
                # x block: squeeze batch dim, lane dim = spatial tile.
                pl.BlockSpec((None, C_in, t_hw), lambda n, j: (n, 0, j)),
                # weight: constant block index -> stays resident in VMEM.
                pl.BlockSpec((C_out, C_in), lambda n, j: (0, 0)),
            ],
            out_specs=[
                pl.BlockSpec((None, C_out, t_hw), lambda n, j: (n, 0, j)),
                pl.BlockSpec((None, C_out, t_hw), lambda n, j: (n, 0, j)),
            ],
        ),
        compiler_params=pltpu.CompilerParams(
            dimension_semantics=("parallel", "parallel"),
            # Covers the ~13 MiB double-buffered working set on v5e (whose
            # scoped default is only 16 MiB) while staying safely under v7x's
            # 64 MiB physical VMEM.
            vmem_limit_bytes=32 * 1024 * 1024,
        ),
    )(x_flat, w)

    # (N, C_out, H*W) is already NCHW-flattened -> pure reshape back.
    out = out_flat.reshape(N, C_out, H, W)
    sig = sig_flat.reshape(N, C_out, H, W)
    return out, sig


if __name__ == "__main__":
    key = jax.random.PRNGKey(0)
    k_x, k_w, k_x2 = jax.random.split(key, 3)

    # Shapes consistent with the module: post_processing_dim is fixed to 768
    # by __init__; pick num_classes=3, batch=2, spatial=16.
    N, C_in, H, W = 2, 768, 16, 16
    num_classes = 3

    x = jax.random.normal(k_x, (N, C_in, H, W), dtype=jnp.float32)
    # Deterministic synthetic conv weight, PyTorch layout (C_out, C_in, 1, 1).
    conv_w = jax.random.normal(k_w, (num_classes, C_in, 1, 1),
                               dtype=jnp.float32) * 0.02

    out, sig = post_processing_standard(x, conv_w)
    jax.block_until_ready((out, sig))

    # Sanity checks against a pure-JAX reference of the 1x1 conv.
    ref = jnp.einsum("nchw,oc->nohw", x, conv_w.reshape(num_classes, C_in))
    assert out.shape == (N, num_classes, H, W)
    assert sig.shape == (N, num_classes, H, W)
    assert jnp.allclose(out, ref, atol=1e-4, rtol=1e-4)
    assert jnp.allclose(sig, jax.nn.sigmoid(ref), atol=1e-5, rtol=1e-5)

    # Second run exercising: partial (masked) last spatial block (H*W = 240,
    # not a lane multiple), bf16 producer-cast input (halved HBM read), and
    # the megacore split path (N=1 -> spatial axis split into 2 grid steps).
    N2, H2, W2 = 1, 16, 15
    x2 = jax.random.normal(k_x2, (N2, C_in, H2, W2),
                           dtype=jnp.float32).astype(jnp.bfloat16)
    out2, sig2 = post_processing_standard(x2, conv_w)
    jax.block_until_ready((out2, sig2))

    ref2 = jnp.einsum("nchw,oc->nohw", x2.astype(jnp.float32),
                      conv_w.reshape(num_classes, C_in))
    assert out2.shape == (N2, num_classes, H2, W2)
    assert sig2.shape == (N2, num_classes, H2, W2)
    assert jnp.allclose(out2.astype(jnp.float32), ref2, atol=2e-2, rtol=2e-2)
    assert jnp.allclose(sig2.astype(jnp.float32), jax.nn.sigmoid(ref2),
                        atol=2e-2, rtol=2e-2)

    print("KERNEL_OK")
</pallas_src>

<mosaic_0001>
module attributes {stable_mosaic.version = 11 : i64} {
  func.func @_postproc_kernel(%arg0: i32, %arg1: i32, %arg2: memref<1x768x256xf32, #tpu.memory_space<vmem>>, %arg3: memref<3x768xf32, #tpu.memory_space<vmem>>, %arg4: memref<1x3x256xf32, #tpu.memory_space<vmem>>, %arg5: memref<1x3x256xf32, #tpu.memory_space<vmem>>) attributes {dimension_semantics = [#tpu.dimension_semantics<parallel>, #tpu.dimension_semantics<parallel>], iteration_bounds = array<i64: 2, 1>, scalar_prefetch = 0 : i64, scratch_operands = 0 : i64, tpu.core_type = #tpu.core_type<tc>, window_params = [{transform_indices = @transform_0, window_bounds = array<i64: 1, 768, 256>}, {pipeline_mode = #tpu.pipeline_mode<synchronous>, transform_indices = @transform_1, window_bounds = array<i64: 3, 768>}, {transform_indices = @transform_2, window_bounds = array<i64: 1, 3, 256>}, {transform_indices = @transform_3, window_bounds = array<i64: 1, 3, 256>}]} {
    %c0 = arith.constant 0 : index
    %c0_0 = arith.constant 0 : index
    %0 = vector.load %arg3[%c0, %c0_0] : memref<3x768xf32, #tpu.memory_space<vmem>>, vector<3x768xf32>
    %c0_1 = arith.constant 0 : index
    %c0_2 = arith.constant 0 : index
    %c0_3 = arith.constant 0 : index
    %1 = vector.load %arg2[%c0_1, %c0_2, %c0_3] : memref<1x768x256xf32, #tpu.memory_space<vmem>>, vector<1x768x256xf32>
    %2 = vector.shape_cast %1 : vector<1x768x256xf32> to vector<768x256xf32>
    %cst = arith.constant dense<0.000000e+00> : vector<3x256xf32>
    %3 = tpu.matmul %0, %2, %cst {dimension_numbers = #tpu.dot_dimension_numbers<[1], [0], [0], [1], [0, 0, 1, 1], [], []>} : vector<3x768xf32>, vector<768x256xf32>, vector<3x256xf32> -> vector<3x256xf32>
    %c0_4 = arith.constant 0 : index
    %c0_5 = arith.constant 0 : index
    %c0_6 = arith.constant 0 : index
    %4 = vector.load %arg4[%c0_4, %c0_5, %c0_6] : memref<1x3x256xf32, #tpu.memory_space<vmem>>, vector<1x3x256xf32>
    %5 = vector.shape_cast %4 : vector<1x3x256xf32> to vector<3x256xf32>
    %6 = vector.shape_cast %3 : vector<3x256xf32> to vector<1x3x256xf32>
    tpu.vector_store %arg4[%c0_4, %c0_5, %c0_6], %6 {strides = array<i32>} : memref<1x3x256xf32, #tpu.memory_space<vmem>>, vector<1x3x256xf32>,
    %7 = arith.negf %3 : vector<3x256xf32>
    %8 = math.exp %7 : vector<3x256xf32>
    %cst_7 = arith.constant 1.000000e+00 : f32
    %9 = vector.broadcast %cst_7 : f32 to vector<3x256xf32>
    %10 = arith.addf %9, %8 : vector<3x256xf32>
    %11 = arith.divf %9, %10 : vector<3x256xf32>
    %c0_8 = arith.constant 0 : index
    %c0_9 = arith.constant 0 : index
    %c0_10 = arith.constant 0 : index
    %12 = vector.load %arg5[%c0_8, %c0_9, %c0_10] : memref<1x3x256xf32, #tpu.memory_space<vmem>>, vector<1x3x256xf32>
    %13 = vector.shape_cast %12 : vector<1x3x256xf32> to vector<3x256xf32>
    %14 = vector.shape_cast %11 : vector<3x256xf32> to vector<1x3x256xf32>
    tpu.vector_store %arg5[%c0_8, %c0_9, %c0_10], %14 {strides = array<i32>} : memref<1x3x256xf32, #tpu.memory_space<vmem>>, vector<1x3x256xf32>,
    return
  }
  func.func @transform_0(%arg0: i32, %arg1: i32) -> (i32, i32, i32) {
    %c0_i32 = arith.constant 0 : i32
    %c0_i32_0 = arith.constant 0 : i32
    return %arg0, %c0_i32, %arg1 : i32, i32, i32
  }
  func.func @transform_1(%arg0: i32, %arg1: i32) -> (i32, i32) {
    %c0_i32 = arith.constant 0 : i32
    %c0_i32_0 = arith.constant 0 : i32
    %c0_i32_1 = arith.constant 0 : i32
    return %c0_i32, %c0_i32_0 : i32, i32
  }
  func.func @transform_2(%arg0: i32, %arg1: i32) -> (i32, i32, i32) {
    %c0_i32 = arith.constant 0 : i32
    %c0_i32_0 = arith.constant 0 : i32
    return %arg0, %c0_i32, %arg1 : i32, i32, i32
  }
  func.func @transform_3(%arg0: i32, %arg1: i32) -> (i32, i32, i32) {
    %c0_i32 = arith.constant 0 : i32
    %c0_i32_0 = arith.constant 0 : i32
    return %arg0, %c0_i32, %arg1 : i32, i32, i32
  }
}

</mosaic_0001>

<llo_original>
// kernel: tpu_custom_call.1
$region0: #{tpu_custom_call.1}
  #allocation0 [shape = 'u32[]', space=smem, size = 0x4, offset = 0x4, fixed_abs, tag = 'smem constant byte address 0x4 - core index']
  #allocation1 [shape = 'u32[144,128]{1,0:T(1,128)}', space=vmem, size = 0x12000, scoped, tag = 'internal scratch']
  %s0 = inlined_call_operand.hbm [shape: f32[2,768,256], index: 0, kind: input, shape index: {}]
  %s1 = inlined_call_operand.hbm [shape: f32[3,768], index: 1, kind: input, shape index: {}]
  %s2 = inlined_call_operand.vmem [shape: f32[2,3,256], index: 2, kind: output, shape index: {0}]
  %s3 = inlined_call_operand.vmem [shape: f32[2,3,256], index: 3, kind: output, shape index: {1}]
  %4 = xla_tuple %s2, %s3
  %s5 = sld [smem:[#allocation0]]
  $region57: #{tpu_custom_call.1} parent=0
    _
  %s7 = ssub.s32 1, %s5
  %s8 = scalar_select 0, %s7, %s5
  $region1: #{tpu_custom_call.1} parent=0
    #allocation2 [shape = 'u8[1572864]{0}', space=vmem, size = 0x180000, scoped, tag = 'input window, operand 0']
    #allocation3 [shape = 's32[2]{0}', space=sflag, size = 0x8, scoped, tag = 'scoped memory for tpu_custom_call.1']
    #allocation4 [shape = 'u8[12288]{0}', space=vmem, size = 0x3000, scoped, tag = 'input window, operand 1, single buffered']
    #allocation5 [shape = 's32[1]{0}', space=sflag, size = 0x4, scoped, tag = 'scoped memory for tpu_custom_call.1']
    %9 = vsyncpa [#allocation3], 0
    %s10 = scalar_lea.sflag [#allocation3], 1
    %11 = vsyncpa %s10, 0
    %12 = vsyncpa [#allocation5], 0
    loop: start=0, step=1, limit=4
    $region2: #{tpu_custom_call.1} parent=1 // loop_pre_header
      _
    $region3: #{tpu_custom_call.1} parent=1 // loop_header
      %s14 = sphi 0, %s18
      %p15 = scmp.ge.s32.totalorder %s14, 4
      %s21 = sphi 0, %s33
      %s22 = sphi 0, %s29
      %s23 = sphi 0, %s21
      %s24 = sphi 0, %s22
      %s25 = sphi 0, %s23
      %s26 = sphi 0, %s24
      %s38 = sphi 0, %s40
      %s41 = sphi 0, %s38
      %s42 = sphi 0, %s41
      %s58 = sphi 0, %s42
      %s62 = sphi 0, %s62
      %s64 = sphi 0, %s62
      %s65 = sphi 0, %s64
      %s79 = sphi 0, %s65
      %s87 = sphi 0, %s89
      %s90 = sphi 0, %s87
      %s91 = sphi 0, %s90
      %s107 = sphi 0, %s91
      %s115 = sphi 0, %s117
      %s118 = sphi 0, %s115
      %s119 = sphi 0, %s118
      %s135 = sphi 0, %s119
    $region4: #{tpu_custom_call.1} parent=1 // loop_header_branch
      %17 = sbr.rel (%p15) target = $region8
    $region5: #{tpu_custom_call.1} parent=1 // loop_body
      %s19 = ssub.s32 %s14, 1
      %s20 = ssub.s32 %s14, 2
      %s27 = sadd.s32 1, %s22
      %p28 = scmp.ge.s32.totalorder %s27, 1
      %s29 = scalar_select %p28, 0, %s27
      %s30 = sadd.s32 1, %s21
      %s31 = scalar_select %p28, %s30, %s21
      %p32 = scmp.ge.s32.totalorder %s31, 2
      %s33 = scalar_select %p32, 0, %s31
      %s34 = ssub.s32 %s21, %s33
      %s35 = ssub.s32 %s22, %s29
      %s36 = sor.u32 %s34, %s35
      %p37 = scmp.eq.s32.totalorder %s36, 0
      %s39 = sadd.s32 %s38, 1
      %s40 = scalar_select %p37, %s38, %s39
      %p43 = pneg %p37
      %p44 = scmp.eq.s32.totalorder %s14, 1
      %p45 = por %p43, %p44
      %p46 = scmp.ne.s32.totalorder %s38, %s41
      %p47 = scmp.eq.s32.totalorder %s14, 0
      %p48 = por %p46, %p47
      %p49 = scmp.ne.s32.totalorder %s38, %s41
      %p50 = scmp.eq.s32.totalorder %s19, 1
      %p51 = por %p49, %p50
      %p52 = scmp.ne.s32.totalorder %s41, %s42
      %p53 = scmp.eq.s32.totalorder %s19, 0
      %p54 = por %p52, %p53
      %p55 = scmp.ne.s32.totalorder %s41, %s42
      %p56 = scmp.eq.s32.totalorder %s20, 1
      %p57 = por %p55, %p56
      %p59 = scmp.ne.s32.totalorder %s42, %s58
      %p60 = scmp.eq.s32.totalorder %s20, 0
      %p61 = por %p59, %p60
      %s63 = sadd.s32 %s62, 1
      %p66 = scmp.eq.s32.totalorder %s14, 1
      %p67 = scmp.ne.s32.totalorder %s62, %s64
      %p68 = scmp.eq.s32.totalorder %s14, 0
      %p69 = por %p67, %p68
      %p70 = scmp.ne.s32.totalorder %s62, %s64
      %p71 = scmp.eq.s32.totalorder %s19, 1
      %p72 = por %p70, %p71
      %p73 = scmp.ne.s32.totalorder %s64, %s65
      %p74 = scmp.eq.s32.totalorder %s19, 0
      %p75 = por %p73, %p74
      %p76 = scmp.ne.s32.totalorder %s64, %s65
      %p77 = scmp.eq.s32.totalorder %s20, 1
      %p78 = por %p76, %p77
      %p80 = scmp.ne.s32.totalorder %s65, %s79
      %p81 = scmp.eq.s32.totalorder %s20, 0
      %p82 = por %p80, %p81
      %s83 = ssub.s32 %s21, %s33
      %s84 = ssub.s32 %s22, %s29
      %s85 = sor.u32 %s83, %s84
      %p86 = scmp.eq.s32.totalorder %s85, 0
      %s88 = sadd.s32 %s87, 1
      %s89 = scalar_select %p86, %s87, %s88
      %p92 = pneg %p86
      %p93 = scmp.eq.s32.totalorder %s14, 1
      %p94 = por %p92, %p93
      %p95 = scmp.ne.s32.totalorder %s87, %s90
      %p96 = scmp.eq.s32.totalorder %s14, 0
      %p97 = por %p95, %p96
      %p98 = scmp.ne.s32.totalorder %s87, %s90
      %p99 = scmp.eq.s32.totalorder %s19, 1
      %p100 = por %p98, %p99
      %p101 = scmp.ne.s32.totalorder %s90, %s91
      %p102 = scmp.eq.s32.totalorder %s19, 0
      %p103 = por %p101, %p102
      %p104 = scmp.ne.s32.totalorder %s90, %s91
      %p105 = scmp.eq.s32.totalorder %s20, 1
      %p106 = por %p104, %p105
      %p108 = scmp.ne.s32.totalorder %s91, %s107
      %p109 = scmp.eq.s32.totalorder %s20, 0
      %p110 = por %p108, %p109
      %s111 = ssub.s32 %s21, %s33
      %s112 = ssub.s32 %s22, %s29
      %s113 = sor.u32 %s111, %s112
      %p114 = scmp.eq.s32.totalorder %s113, 0
      %s116 = sadd.s32 %s115, 1
      %s117 = scalar_select %p114, %s115, %s116
      %p120 = pneg %p114
      %p121 = scmp.eq.s32.totalorder %s14, 1
      %p122 = por %p120, %p121
      %p123 = scmp.ne.s32.totalorder %s115, %s118
      %p124 = scmp.eq.s32.totalorder %s14, 0
      %p125 = por %p123, %p124
      %p126 = scmp.ne.s32.totalorder %s115, %s118
      %p127 = scmp.eq.s32.totalorder %s19, 1
      %p128 = por %p126, %p127
      %p129 = scmp.ne.s32.totalorder %s118, %s119
      %p130 = scmp.eq.s32.totalorder %s19, 0
      %p131 = por %p129, %p130
      %p132 = scmp.ne.s32.totalorder %s118, %s119
      %p133 = scmp.eq.s32.totalorder %s20, 1
      %p134 = por %p132, %p133
      %p136 = scmp.ne.s32.totalorder %s119, %s135
      %p137 = scmp.eq.s32.totalorder %s20, 0
      %p138 = por %p136, %p137
      %p139 = scmp.le.s32.totalorder 1, %s14
      %p140 = scmp.lt.s32.totalorder %s14, 3
      %p141 = pnand %p139, %p140
      %p142 = pneg %p141
      // Predicated region
      $region9: #{tpu_custom_call.1} parent=5 // pred_check
        _
      $region10: #{tpu_custom_call.1} parent=5 // pred_check_branch
        %144 = sbr.rel (%p141) target = $region12
      $region11: #{tpu_custom_call.1} parent=5 // pred_region
        %s145 = ssub.s32 %s14, 1
        // Predicated region
        $region13: #{tpu_custom_call.1} parent=11 // pred_check
          %p146 = pneg %p75
        $region14: #{tpu_custom_call.1} parent=11 // pred_check_branch
          %148 = sbr.rel (%p146) target = $region16
        $region15: #{tpu_custom_call.1} parent=11 // pred_region
          %s150 = ssub.s32 384, 384
          %151 = vsyncadd [#allocation5], %s150
          %s153 = sshll.u32 [#allocation4], 4
          %s154 = int_to_ptr.vmem [resolvable:$true] %s153
          %156 = dma.hbm_to_vmem [thread:$0]  %s1, 384, %s154, [#allocation5]
        $region16: #{tpu_custom_call.1} parent=11 // pred_fallthru
          _
      $region12: #{tpu_custom_call.1} parent=5 // pred_fallthru
        _
      %p157 = scmp.lt.s32.totalorder %s14, 2
      // Predicated region
      $region17: #{tpu_custom_call.1} parent=5 // pred_check
        %p158 = pneg %p157
      $region18: #{tpu_custom_call.1} parent=5 // pred_check_branch
        %160 = sbr.rel (%p158) target = $region20
      $region19: #{tpu_custom_call.1} parent=5 // pred_region
        // Predicated region
        $region21: #{tpu_custom_call.1} parent=19 // pred_check
          %p161 = pneg %p48
        $region22: #{tpu_custom_call.1} parent=19 // pred_check_branch
          %163 = sbr.rel (%p161) target = $region24
        $region23: #{tpu_custom_call.1} parent=19 // pred_region
          %s164 = sand.u32 %s38, 1
          %s165 = scalar_lea.sflag [#allocation3], %s164
          %s166 = sand.u32 %s38, 1
          %s167 = smul.addr %s166, 1536
          %s168 = scalar_lea.vmem [#allocation2], %s167
          %s169 = smul.u32 2, %s22
          %s171 = ssub.s32 24576, 24576
          %172 = vsyncadd %s165, %s171
          %s173 = smul.addr %s21, 192
          %s174 = sadd.s32 %s169, %s173
          %s175 = smul.addr %s174, 128
          %s176 = scalar_lea.hbm %s0, %s175
          %s177 = sshll.u32 %s168, 4
          %s178 = int_to_ptr.vmem [resolvable:$true] %s177
          %183 = dma.hbm_to_vmem [thread:$0]  %s176, 24576, %s178, %s165, 256, 256, 16
        $region24: #{tpu_custom_call.1} parent=19 // pred_fallthru
          _
      $region20: #{tpu_custom_call.1} parent=5 // pred_fallthru
        _
      %p184 = scmp.le.s32.totalorder 1, %s14
      %p185 = scmp.lt.s32.totalorder %s14, 3
      %p186 = pnand %p184, %p185
      %p187 = pneg %p186
      // Predicated region
      $region25: #{tpu_custom_call.1} parent=5 // pred_check
        _
      $region26: #{tpu_custom_call.1} parent=5 // pred_check_branch
        %189 = sbr.rel (%p186) target = $region28
      $region27: #{tpu_custom_call.1} parent=5 // pred_region
        %s190 = ssub.s32 %s14, 1
        %s191 = sand.u32 %s41, 1
        %s192 = scalar_lea.sflag [#allocation3], %s191
        %s193 = sand.u32 %s41, 1
        %s194 = smul.addr %s193, 1536
        %s195 = scalar_lea.vmem [#allocation2], %s194
        // Predicated region
        $region29: #{tpu_custom_call.1} parent=27 // pred_check
          %p196 = pneg %p54
        $region30: #{tpu_custom_call.1} parent=27 // pred_check_branch
          %198 = sbr.rel (%p196) target = $region32
        $region31: #{tpu_custom_call.1} parent=27 // pred_region
          %199 = dma.done %s192, 24576
        $region32: #{tpu_custom_call.1} parent=27 // pred_fallthru
          _
        // Predicated region
        $region33: #{tpu_custom_call.1} parent=27 // pred_check
          %p200 = pneg %p75
        $region34: #{tpu_custom_call.1} parent=27 // pred_check_branch
          %202 = sbr.rel (%p200) target = $region36
        $region35: #{tpu_custom_call.1} parent=27 // pred_region
          %203 = dma.done [#allocation5], 384
        $region36: #{tpu_custom_call.1} parent=27 // pred_fallthru
          _
        %s204 = sand.u32 %s41, 1
        %s205 = scalar_lea.sflag [#allocation3], %s204
        %s206 = sand.u32 %s41, 1
        %s207 = smul.addr %s206, 1536
        %s208 = scalar_lea.vmem [#allocation2], %s207
        %p209 = pneg %p54
        %p210 = pneg %p51
        %p211 = pneg %p75
        %p212 = pneg %p72
        %p213 = pneg %p103
        %p214 = pneg %p100
        %s215 = smul.u32 2, %s24
        %p216 = scmp.lt.s32.totalorder %s23, 1
        %s217 = scalar_select %p216, %s23, 1
        %p218 = scmp.lt.s32.totalorder %s215, 1
        %s219 = scalar_select %p218, %s215, 1
        %s220 = smul.addr %s217, 2
        %s221 = sadd.s32 %s219, %s220
        %s222 = smul.addr %s221, 4
        %s223 = scalar_lea.vmem %s2, %s222
        %p224 = pneg %p131
        %p225 = pneg %p128
        %s226 = smul.u32 2, %s24
        %p227 = scmp.lt.s32.totalorder %s23, 1
        %s228 = scalar_select %p227, %s23, 1
        %p229 = scmp.lt.s32.totalorder %s226, 1
        %s230 = scalar_select %p229, %s226, 1
        %s231 = smul.addr %s228, 2
        %s232 = sadd.s32 %s230, %s231
        %s233 = smul.addr %s232, 4
        %s234 = scalar_lea.vmem %s3, %s233
        %s235 = smul.u32 2, %s24
        %s236 = smul.u32 2, %s24
        %p237 = scmp.lt.s32.totalorder %s23, 1
        %s238 = scalar_select %p237, %s23, 1
        %p239 = scmp.lt.s32.totalorder %s236, 1
        %s240 = scalar_select %p239, %s236, 1
        %s241 = smul.addr %s238, 2
        %s242 = sadd.s32 %s240, %s241
        %s243 = smul.addr %s242, 4
        %s244 = scalar_lea.vmem %s2, %s243
        %s245 = smul.u32 2, %s24
        %s246 = smul.u32 2, %s24
        %p247 = scmp.lt.s32.totalorder %s23, 1
        %s248 = scalar_select %p247, %s23, 1
        %p249 = scmp.lt.s32.totalorder %s246, 1
        %s250 = scalar_select %p249, %s246, 1
        %s251 = smul.addr %s248, 2
        %s252 = sadd.s32 %s250, %s251
        %s253 = smul.addr %s252, 4
        %s254 = scalar_lea.vmem %s3, %s253
        %s255 = smul.u32 2, %s24
        %v256 = vld [vmem:[#allocation4] sm:$0x77]
        %v257 = vld [vmem:[#allocation4 + $0x8] sm:$0x77]
        %v258 = vld [vmem:[#allocation4 + $0x10] sm:$0x77]
        %v259 = vld [vmem:[%s195] sm:$0xff]
        %v260 = vld [vmem:[%s195 + $0x8] sm:$0xff]
        %v261 = vld [vmem:[%s195 + $0x10] sm:$0xff]
        %v262 = vld [vmem:[%s195 + $0x18] sm:$0xff]
        %v263 = vld [vmem:[%s195 + $0x20] sm:$0xff]
        %v264 = vld [vmem:[%s195 + $0x28] sm:$0xff]
        %v265 = vld [vmem:[%s195 + $0x30] sm:$0xff]
        %v266 = vld [vmem:[%s195 + $0x38] sm:$0xff]
        %v267 = vld [vmem:[%s195 + $0x40] sm:$0xff]
        %v268 = vld [vmem:[%s195 + $0x48] sm:$0xff]
        %v269 = vld [vmem:[%s195 + $0x50] sm:$0xff]
        %v270 = vld [vmem:[%s195 + $0x58] sm:$0xff]
        %v271 = vld [vmem:[%s195 + $0x60] sm:$0xff]
        %v272 = vld [vmem:[%s195 + $0x68] sm:$0xff]
        %v273 = vld [vmem:[%s195 + $0x70] sm:$0xff]
        %v274 = vld [vmem:[%s195 + $0x78] sm:$0xff]
        %v275 = vld [vmem:[%s195 + $0x80] sm:$0xff]
        %v276 = vld [vmem:[%s195 + $0x88] sm:$0xff]
        %v277 = vld [vmem:[%s195 + $0x90] sm:$0xff]
        %v278 = vld [vmem:[%s195 + $0x98] sm:$0xff]
        %v279 = vld [vmem:[%s195 + $0xa0] sm:$0xff]
        %v280 = vld [vmem:[%s195 + $0xa8] sm:$0xff]
        %v281 = vld [vmem:[%s195 + $0xb0] sm:$0xff]
        %v282 = vld [vmem:[%s195 + $0xb8] sm:$0xff]
        %v283 = vld [vmem:[%s195 + $0xc0] sm:$0xff]
        %v284 = vld [vmem:[%s195 + $0xc8] sm:$0xff]
        %v285 = vld [vmem:[%s195 + $0xd0] sm:$0xff]
        %v286 = vld [vmem:[%s195 + $0xd8] sm:$0xff]
        %v287 = vld [vmem:[%s195 + $0xe0] sm:$0xff]
        %v288 = vld [vmem:[%s195 + $0xe8] sm:$0xff]
        %v289 = vld [vmem:[%s195 + $0xf0] sm:$0xff]
        %v290 = vld [vmem:[%s195 + $0xf8] sm:$0xff]
        %v291 = vld [vmem:[%s195 + $0x100] sm:$0xff]
        %v292 = vld [vmem:[%s195 + $0x108] sm:$0xff]
        %v293 = vld [vmem:[%s195 + $0x110] sm:$0xff]
        %v294 = vld [vmem:[%s195 + $0x118] sm:$0xff]
        %v295 = vld [vmem:[%s195 + $0x120] sm:$0xff]
        %v296 = vld [vmem:[%s195 + $0x128] sm:$0xff]
        %v297 = vld [vmem:[%s195 + $0x130] sm:$0xff]
        %v298 = vld [vmem:[%s195 + $0x138] sm:$0xff]
        %v299 = vld [vmem:[%s195 + $0x140] sm:$0xff]
        %v300 = vld [vmem:[%s195 + $0x148] sm:$0xff]
        %v301 = vld [vmem:[%s195 + $0x150] sm:$0xff]
        %v302 = vld [vmem:[%s195 + $0x158] sm:$0xff]
        %v303 = vld [vmem:[%s195 + $0x160] sm:$0xff]
        %v304 = vld [vmem:[%s195 + $0x168] sm:$0xff]
        %v305 = vld [vmem:[%s195 + $0x170] sm:$0xff]
        %v306 = vld [vmem:[%s195 + $0x178] sm:$0xff]
        %v307 = vld [vmem:[%s195 + $0x180] sm:$0xff]
        %v308 = vld [vmem:[%s195 + $0x188] sm:$0xff]
        %v309 = vld [vmem:[%s195 + $0x190] sm:$0xff]
        %v310 = vld [vmem:[%s195 + $0x198] sm:$0xff]
        %v311 = vld [vmem:[%s195 + $0x1a0] sm:$0xff]
        %v312 = vld [vmem:[%s195 + $0x1a8] sm:$0xff]
        %v313 = vld [vmem:[%s195 + $0x1b0] sm:$0xff]
        %v314 = vld [vmem:[%s195 + $0x1b8] sm:$0xff]
        %v315 = vld [vmem:[%s195 + $0x1c0] sm:$0xff]
        %v316 = vld [vmem:[%s195 + $0x1c8] sm:$0xff]
        %v317 = vld [vmem:[%s195 + $0x1d0] sm:$0xff]
        %v318 = vld [vmem:[%s195 + $0x1d8] sm:$0xff]
        %v319 = vld [vmem:[%s195 + $0x1e0] sm:$0xff]
        %v320 = vld [vmem:[%s195 + $0x1e8] sm:$0xff]
        %v321 = vld [vmem:[%s195 + $0x1f0] sm:$0xff]
        %v322 = vld [vmem:[%s195 + $0x1f8] sm:$0xff]
        %v323 = vld [vmem:[%s195 + $0x200] sm:$0xff]
        %v324 = vld [vmem:[%s195 + $0x208] sm:$0xff]
        %v325 = vld [vmem:[%s195 + $0x210] sm:$0xff]
        %v326 = vld [vmem:[%s195 + $0x218] sm:$0xff]
        %v327 = vld [vmem:[%s195 + $0x220] sm:$0xff]
        %v328 = vld [vmem:[%s195 + $0x228] sm:$0xff]
        %v329 = vld [vmem:[%s195 + $0x230] sm:$0xff]
        %v330 = vld [vmem:[%s195 + $0x238] sm:$0xff]
        %v331 = vld [vmem:[%s195 + $0x240] sm:$0xff]
        %v332 = vld [vmem:[%s195 + $0x248] sm:$0xff]
        %v333 = vld [vmem:[%s195 + $0x250] sm:$0xff]
        %v334 = vld [vmem:[%s195 + $0x258] sm:$0xff]
        %v335 = vld [vmem:[%s195 + $0x260] sm:$0xff]
        %v336 = vld [vmem:[%s195 + $0x268] sm:$0xff]
        %v337 = vld [vmem:[%s195 + $0x270] sm:$0xff]
        %v338 = vld [vmem:[%s195 + $0x278] sm:$0xff]
        %v339 = vld [vmem:[%s195 + $0x280] sm:$0xff]
        %v340 = vld [vmem:[%s195 + $0x288] sm:$0xff]
        %v341 = vld [vmem:[%s195 + $0x290] sm:$0xff]
        %v342 = vld [vmem:[%s195 + $0x298] sm:$0xff]
        %v343 = vld [vmem:[%s195 + $0x2a0] sm:$0xff]
        %v344 = vld [vmem:[%s195 + $0x2a8] sm:$0xff]
        %v345 = vld [vmem:[%s195 + $0x2b0] sm:$0xff]
        %v346 = vld [vmem:[%s195 + $0x2b8] sm:$0xff]
        %v347 = vld [vmem:[%s195 + $0x2c0] sm:$0xff]
        %v348 = vld [vmem:[%s195 + $0x2c8] sm:$0xff]
        %v349 = vld [vmem:[%s195 + $0x2d0] sm:$0xff]
        %v350 = vld [vmem:[%s195 + $0x2d8] sm:$0xff]
        %v351 = vld [vmem:[%s195 + $0x2e0] sm:$0xff]
        %v352 = vld [vmem:[%s195 + $0x2e8] sm:$0xff]
        %v353 = vld [vmem:[%s195 + $0x2f0] sm:$0xff]
        %v354 = vld [vmem:[%s195 + $0x2f8] sm:$0xff]
        %v355 = vld [vmem:[%s195 + $0x300] sm:$0xff]
        %v356 = vld [vmem:[%s195 + $0x308] sm:$0xff]
        %v357 = vld [vmem:[%s195 + $0x310] sm:$0xff]
        %v358 = vld [vmem:[%s195 + $0x318] sm:$0xff]
        %v359 = vld [vmem:[%s195 + $0x320] sm:$0xff]
        %v360 = vld [vmem:[%s195 + $0x328] sm:$0xff]
        %v361 = vld [vmem:[%s195 + $0x330] sm:$0xff]
        %v362 = vld [vmem:[%s195 + $0x338] sm:$0xff]
        %v363 = vld [vmem:[%s195 + $0x340] sm:$0xff]
        %v364 = vld [vmem:[%s195 + $0x348] sm:$0xff]
        %v365 = vld [vmem:[%s195 + $0x350] sm:$0xff]
        %v366 = vld [vmem:[%s195 + $0x358] sm:$0xff]
        %v367 = vld [vmem:[%s195 + $0x360] sm:$0xff]
        %v368 = vld [vmem:[%s195 + $0x368] sm:$0xff]
        %v369 = vld [vmem:[%s195 + $0x370] sm:$0xff]
        %v370 = vld [vmem:[%s195 + $0x378] sm:$0xff]
        %v371 = vld [vmem:[%s195 + $0x380] sm:$0xff]
        %v372 = vld [vmem:[%s195 + $0x388] sm:$0xff]
        %v373 = vld [vmem:[%s195 + $0x390] sm:$0xff]
        %v374 = vld [vmem:[%s195 + $0x398] sm:$0xff]
        %v375 = vld [vmem:[%s195 + $0x3a0] sm:$0xff]
        %v376 = vld [vmem:[%s195 + $0x3a8] sm:$0xff]
        %v377 = vld [vmem:[%s195 + $0x3b0] sm:$0xff]
        %v378 = vld [vmem:[%s195 + $0x3b8] sm:$0xff]
        %v379 = vld [vmem:[%s195 + $0x3c0] sm:$0xff]
        %v380 = vld [vmem:[%s195 + $0x3c8] sm:$0xff]
        %v381 = vld [vmem:[%s195 + $0x3d0] sm:$0xff]
        %v382 = vld [vmem:[%s195 + $0x3d8] sm:$0xff]
        %v383 = vld [vmem:[%s195 + $0x3e0] sm:$0xff]
        %v384 = vld [vmem:[%s195 + $0x3e8] sm:$0xff]
        %v385 = vld [vmem:[%s195 + $0x3f0] sm:$0xff]
        %v386 = vld [vmem:[%s195 + $0x3f8] sm:$0xff]
        %v387 = vld [vmem:[%s195 + $0x400] sm:$0xff]
        %v388 = vld [vmem:[%s195 + $0x408] sm:$0xff]
        %v389 = vld [vmem:[%s195 + $0x410] sm:$0xff]
        %v390 = vld [vmem:[%s195 + $0x418] sm:$0xff]
        %v391 = vld [vmem:[%s195 + $0x420] sm:$0xff]
        %v392 = vld [vmem:[%s195 + $0x428] sm:$0xff]
        %v393 = vld [vmem:[%s195 + $0x430] sm:$0xff]
        %v394 = vld [vmem:[%s195 + $0x438] sm:$0xff]
        %v395 = vld [vmem:[%s195 + $0x440] sm:$0xff]
        %v396 = vld [vmem:[%s195 + $0x448] sm:$0xff]
        %v397 = vld [vmem:[%s195 + $0x450] sm:$0xff]
        %v398 = vld [vmem:[%s195 + $0x458] sm:$0xff]
        %v399 = vld [vmem:[%s195 + $0x460] sm:$0xff]
        %v400 = vld [vmem:[%s195 + $0x468] sm:$0xff]
        %v401 = vld [vmem:[%s195 + $0x470] sm:$0xff]
        %v402 = vld [vmem:[%s195 + $0x478] sm:$0xff]
        %v403 = vld [vmem:[%s195 + $0x480] sm:$0xff]
        %v404 = vld [vmem:[%s195 + $0x488] sm:$0xff]
        %v405 = vld [vmem:[%s195 + $0x490] sm:$0xff]
        %v406 = vld [vmem:[%s195 + $0x498] sm:$0xff]
        %v407 = vld [vmem:[%s195 + $0x4a0] sm:$0xff]
        %v408 = vld [vmem:[%s195 + $0x4a8] sm:$0xff]
        %v409 = vld [vmem:[%s195 + $0x4b0] sm:$0xff]
        %v410 = vld [vmem:[%s195 + $0x4b8] sm:$0xff]
        %v411 = vld [vmem:[%s195 + $0x4c0] sm:$0xff]
        %v412 = vld [vmem:[%s195 + $0x4c8] sm:$0xff]
        %v413 = vld [vmem:[%s195 + $0x4d0] sm:$0xff]
        %v414 = vld [vmem:[%s195 + $0x4d8] sm:$0xff]
        %v415 = vld [vmem:[%s195 + $0x4e0] sm:$0xff]
        %v416 = vld [vmem:[%s195 + $0x4e8] sm:$0xff]
        %v417 = vld [vmem:[%s195 + $0x4f0] sm:$0xff]
        %v418 = vld [vmem:[%s195 + $0x4f8] sm:$0xff]
        %v419 = vld [vmem:[%s195 + $0x500] sm:$0xff]
        %v420 = vld [vmem:[%s195 + $0x508] sm:$0xff]
        %v421 = vld [vmem:[%s195 + $0x510] sm:$0xff]
        %v422 = vld [vmem:[%s195 + $0x518] sm:$0xff]
        %v423 = vld [vmem:[%s195 + $0x520] sm:$0xff]
        %v424 = vld [vmem:[%s195 + $0x528] sm:$0xff]
        %v425 = vld [vmem:[%s195 + $0x530] sm:$0xff]
        %v426 = vld [vmem:[%s195 + $0x538] sm:$0xff]
        %v427 = vld [vmem:[%s195 + $0x540] sm:$0xff]
        %v428 = vld [vmem:[%s195 + $0x548] sm:$0xff]
        %v429 = vld [vmem:[%s195 + $0x550] sm:$0xff]
        %v430 = vld [vmem:[%s195 + $0x558] sm:$0xff]
        %v431 = vld [vmem:[%s195 + $0x560] sm:$0xff]
        %v432 = vld [vmem:[%s195 + $0x568] sm:$0xff]
        %v433 = vld [vmem:[%s195 + $0x570] sm:$0xff]
        %v434 = vld [vmem:[%s195 + $0x578] sm:$0xff]
        %v435 = vld [vmem:[%s195 + $0x580] sm:$0xff]
        %v436 = vld [vmem:[%s195 + $0x588] sm:$0xff]
        %v437 = vld [vmem:[%s195 + $0x590] sm:$0xff]
        %v438 = vld [vmem:[%s195 + $0x598] sm:$0xff]
        %v439 = vld [vmem:[%s195 + $0x5a0] sm:$0xff]
        %v440 = vld [vmem:[%s195 + $0x5a8] sm:$0xff]
        %v441 = vld [vmem:[%s195 + $0x5b0] sm:$0xff]
        %v442 = vld [vmem:[%s195 + $0x5b8] sm:$0xff]
        %v443 = vld [vmem:[%s195 + $0x5c0] sm:$0xff]
        %v444 = vld [vmem:[%s195 + $0x5c8] sm:$0xff]
        %v445 = vld [vmem:[%s195 + $0x5d0] sm:$0xff]
        %v446 = vld [vmem:[%s195 + $0x5d8] sm:$0xff]
        %v447 = vld [vmem:[%s195 + $0x5e0] sm:$0xff]
        %v448 = vld [vmem:[%s195 + $0x5e8] sm:$0xff]
        %v449 = vld [vmem:[%s195 + $0x5f0] sm:$0xff]
        %v450 = vld [vmem:[%s195 + $0x5f8] sm:$0xff]
        %v454 = vcombine.high %v256, %v256
        %v455 = vcombine.high %v257, %v257
        %v456 = vcombine.high %v258, %v258
        %460 = vmatprep.subr.mxu0 %v290
        %461 = vmatpush1.msra.mxu0 %v289
        %462 = vmatprep.subr.mxu0 %v288
        %463 = vmatpush1.msra.mxu0 %v287
        %464 = vmatprep.subr.mxu0 %v286
        %465 = vmatpush1.msra.mxu0 %v285
        %466 = vmatprep.subr.mxu0 %v284
        %467 = vmatpush1.msra.mxu0 %v283
        %468 = vmatprep.subr.mxu0 %v282
        %469 = vmatpush1.msra.mxu0 %v281
        %470 = vmatprep.subr.mxu0 %v280
        %471 = vmatpush1.msra.mxu0 %v279
        %472 = vmatprep.subr.mxu0 %v278
        %473 = vmatpush1.msra.mxu0 %v277
        %474 = vmatprep.subr.mxu0 %v276
        %475 = vmatpush1.msra.mxu0 %v275
        %476 = vmatprep.subr.mxu0 %v274
        %477 = vmatpush1.msra.mxu0 %v273
        %478 = vmatprep.subr.mxu0 %v272
        %479 = vmatpush1.msra.mxu0 %v271
        %480 = vmatprep.subr.mxu0 %v270
        %481 = vmatpush1.msra.mxu0 %v269
        %482 = vmatprep.subr.mxu0 %v268
        %483 = vmatpush1.msra.mxu0 %v267
        %484 = vmatprep.subr.mxu0 %v266
        %485 = vmatpush1.msra.mxu0 %v265
        %486 = vmatprep.subr.mxu0 %v264
        %487 = vmatpush1.msra.mxu0 %v263
        %488 = vmatprep.subr.mxu0 %v262
        %489 = vmatpush1.msra.mxu0 %v261
        %490 = vmatprep.subr.mxu0 %v260
        %491 = vmatpush1.msra.mxu0 %v259
        %492 = vmatprep.subr.mxu0 %v322
        %493 = vmatpush2.msra.mxu0 %v321
        %494 = vmatprep.subr.mxu0 %v320
        %495 = vmatpush2.msra.mxu0 %v319
        %496 = vmatprep.subr.mxu0 %v318
        %497 = vmatpush2.msra.mxu0 %v317
        %498 = vmatprep.subr.mxu0 %v316
        %499 = vmatpush2.msra.mxu0 %v315
        %500 = vmatprep.subr.mxu0 %v314
        %501 = vmatpush2.msra.mxu0 %v313
        %502 = vmatprep.subr.mxu0 %v312
        %503 = vmatpush2.msra.mxu0 %v311
        %504 = vmatprep.subr.mxu0 %v310
        %505 = vmatpush2.msra.mxu0 %v309
        %506 = vmatprep.subr.mxu0 %v308
        %507 = vmatpush2.msra.mxu0 %v307
        %508 = vmatprep.subr.mxu0 %v306
        %509 = vmatpush2.msra.mxu0 %v305
        %510 = vmatprep.subr.mxu0 %v304
        %511 = vmatpush2.msra.mxu0 %v303
        %512 = vmatprep.subr.mxu0 %v302
        %513 = vmatpush2.msra.mxu0 %v301
        %514 = vmatprep.subr.mxu0 %v300
        %515 = vmatpush2.msra.mxu0 %v299
        %516 = vmatprep.subr.mxu0 %v298
        %517 = vmatpush2.msra.mxu0 %v297
        %518 = vmatprep.subr.mxu0 %v296
        %519 = vmatpush2.msra.mxu0 %v295
        %520 = vmatprep.subr.mxu0 %v294
        %521 = vmatpush2.msra.mxu0 %v293
        %522 = vmatprep.subr.mxu0 %v292
        %523 = vmatpush2.msra.mxu0 %v291
        %524 = vmatprep.mubr.f32.mxu0 %v454
        %525 = vmatmul.mubr.f32.gmra.mxu0 %v256
        %v526 = vpop.f32.mrf.mxu0
        %v527 = vadd.f32 0.0, %v526
        %v528 = vpop.f32.mrf.mxu0
        %v529 = vadd.f32 0.0, %v528
        %530 = vdwg.mxu0
        %531 = vmatprep.subr.mxu0 %v354
        %532 = vmatpush1.msra.mxu0 %v353
        %533 = vmatprep.subr.mxu0 %v352
        %534 = vmatpush1.msra.mxu0 %v351
        %535 = vmatprep.subr.mxu0 %v350
        %536 = vmatpush1.msra.mxu0 %v349
        %537 = vmatprep.subr.mxu0 %v348
        %538 = vmatpush1.msra.mxu0 %v347
        %539 = vmatprep.subr.mxu0 %v346
        %540 = vmatpush1.msra.mxu0 %v345
        %541 = vmatprep.subr.mxu0 %v344
        %542 = vmatpush1.msra.mxu0 %v343
        %543 = vmatprep.subr.mxu0 %v342
        %544 = vmatpush1.msra.mxu0 %v341
        %545 = vmatprep.subr.mxu0 %v340
        %546 = vmatpush1.msra.mxu0 %v339
        %547 = vmatprep.subr.mxu0 %v338
        %548 = vmatpush1.msra.mxu0 %v337
        %549 = vmatprep.subr.mxu0 %v336
        %550 = vmatpush1.msra.mxu0 %v335
        %551 = vmatprep.subr.mxu0 %v334
        %552 = vmatpush1.msra.mxu0 %v333
        %553 = vmatprep.subr.mxu0 %v332
        %554 = vmatpush1.msra.mxu0 %v331
        %555 = vmatprep.subr.mxu0 %v330
        %556 = vmatpush1.msra.mxu0 %v329
        %557 = vmatprep.subr.mxu0 %v328
        %558 = vmatpush1.msra.mxu0 %v327
        %559 = vmatprep.subr.mxu0 %v326
        %560 = vmatpush1.msra.mxu0 %v325
        %561 = vmatprep.subr.mxu0 %v324
        %562 = vmatpush1.msra.mxu0 %v323
        %563 = vmatprep.subr.mxu0 %v386
        %564 = vmatpush2.msra.mxu0 %v385
        %565 = vmatprep.subr.mxu0 %v384
        %566 = vmatpush2.msra.mxu0 %v383
        %567 = vmatprep.subr.mxu0 %v382
        %568 = vmatpush2.msra.mxu0 %v381
        %569 = vmatprep.subr.mxu0 %v380
        %570 = vmatpush2.msra.mxu0 %v379
        %571 = vmatprep.subr.mxu0 %v378
        %572 = vmatpush2.msra.mxu0 %v377
        %573 = vmatprep.subr.mxu0 %v376
        %574 = vmatpush2.msra.mxu0 %v375
        %575 = vmatprep.subr.mxu0 %v374
        %576 = vmatpush2.msra.mxu0 %v373
        %577 = vmatprep.subr.mxu0 %v372
        %578 = vmatpush2.msra.mxu0 %v371
        %579 = vmatprep.subr.mxu0 %v370
        %580 = vmatpush2.msra.mxu0 %v369
        %581 = vmatprep.subr.mxu0 %v368
        %582 = vmatpush2.msra.mxu0 %v367
        %583 = vmatprep.subr.mxu0 %v366
        %584 = vmatpush2.msra.mxu0 %v365
        %585 = vmatprep.subr.mxu0 %v364
        %586 = vmatpush2.msra.mxu0 %v363
        %587 = vmatprep.subr.mxu0 %v362
        %588 = vmatpush2.msra.mxu0 %v361
        %589 = vmatprep.subr.mxu0 %v360
        %590 = vmatpush2.msra.mxu0 %v359
        %591 = vmatprep.subr.mxu0 %v358
        %592 = vmatpush2.msra.mxu0 %v357
        %593 = vmatprep.subr.mxu0 %v356
        %594 = vmatpush2.msra.mxu0 %v355
        %595 = vmatprep.mubr.f32.mxu0 %v455
        %596 = vmatmul.mubr.f32.gmra.mxu0 %v257
        %v597 = vpop.f32.mrf.mxu0
        %v598 = vadd.f32 %v527, %v597
        %v599 = vpop.f32.mrf.mxu0
        %v600 = vadd.f32 %v529, %v599
        %601 = vdwg.mxu0
        %602 = vmatprep.subr.mxu0 %v418
        %603 = vmatpush1.msra.mxu0 %v417
        %604 = vmatprep.subr.mxu0 %v416
        %605 = vmatpush1.msra.mxu0 %v415
        %606 = vmatprep.subr.mxu0 %v414
        %607 = vmatpush1.msra.mxu0 %v413
        %608 = vmatprep.subr.mxu0 %v412
        %609 = vmatpush1.msra.mxu0 %v411
        %610 = vmatprep.subr.mxu0 %v410
        %611 = vmatpush1.msra.mxu0 %v409
        %612 = vmatprep.subr.mxu0 %v408
        %613 = vmatpush1.msra.mxu0 %v407
        %614 = vmatprep.subr.mxu0 %v406
        %615 = vmatpush1.msra.mxu0 %v405
        %616 = vmatprep.subr.mxu0 %v404
        %617 = vmatpush1.msra.mxu0 %v403
        %618 = vmatprep.subr.mxu0 %v402
        %619 = vmatpush1.msra.mxu0 %v401
        %620 = vmatprep.subr.mxu0 %v400
        %621 = vmatpush1.msra.mxu0 %v399
        %622 = vmatprep.subr.mxu0 %v398
        %623 = vmatpush1.msra.mxu0 %v397
        %624 = vmatprep.subr.mxu0 %v396
        %625 = vmatpush1.msra.mxu0 %v395
        %626 = vmatprep.subr.mxu0 %v394
        %627 = vmatpush1.msra.mxu0 %v393
        %628 = vmatprep.subr.mxu0 %v392
        %629 = vmatpush1.msra.mxu0 %v391
        %630 = vmatprep.subr.mxu0 %v390
        %631 = vmatpush1.msra.mxu0 %v389
        %632 = vmatprep.subr.mxu0 %v388
        %633 = vmatpush1.msra.mxu0 %v387
        %634 = vmatprep.subr.mxu0 %v450
        %635 = vmatpush2.msra.mxu0 %v449
        %636 = vmatprep.subr.mxu0 %v448
        %637 = vmatpush2.msra.mxu0 %v447
        %638 = vmatprep.subr.mxu0 %v446
        %639 = vmatpush2.msra.mxu0 %v445
        %640 = vmatprep.subr.mxu0 %v444
        %641 = vmatpush2.msra.mxu0 %v443
        %642 = vmatprep.subr.mxu0 %v442
        %643 = vmatpush2.msra.mxu0 %v441
        %644 = vmatprep.subr.mxu0 %v440
        %645 = vmatpush2.msra.mxu0 %v439
        %646 = vmatprep.subr.mxu0 %v438
        %647 = vmatpush2.msra.mxu0 %v437
        %648 = vmatprep.subr.mxu0 %v436
        %649 = vmatpush2.msra.mxu0 %v435
        %650 = vmatprep.subr.mxu0 %v434
        %651 = vmatpush2.msra.mxu0 %v433
        %652 = vmatprep.subr.mxu0 %v432
        %653 = vmatpush2.msra.mxu0 %v431
        %654 = vmatprep.subr.mxu0 %v430
        %655 = vmatpush2.msra.mxu0 %v429
        %656 = vmatprep.subr.mxu0 %v428
        %657 = vmatpush2.msra.mxu0 %v427
        %658 = vmatprep.subr.mxu0 %v426
        %659 = vmatpush2.msra.mxu0 %v425
        %660 = vmatprep.subr.mxu0 %v424
        %661 = vmatpush2.msra.mxu0 %v423
        %662 = vmatprep.subr.mxu0 %v422
        %663 = vmatpush2.msra.mxu0 %v421
        %664 = vmatprep.subr.mxu0 %v420
        %665 = vmatpush2.msra.mxu0 %v419
        %666 = vmatprep.mubr.f32.mxu0 %v456
        %667 = vmatmul.mubr.f32.gmra.mxu0 %v258
        %v668 = vpop.f32.mrf.mxu0
        %v669 = vadd.f32 %v598, %v668
        %v670 = vpop.f32.mrf.mxu0
        %v671 = vadd.f32 %v600, %v670
        %672 = vdwg.mxu0
        %v675 = vcombine.low %v669, %v671
        %677 = vst [vmem:[%s244] sm:$0x77] %v675
        %v678 = vxor.u32 %v669, 2147483648
        %v679 = vxor.u32 %v671, 2147483648
        %v680 = vmul.f32 %v678, 1.442695
        %v681 = vpow.pop %v680
        %v682 = vmul.f32 %v679, 1.442695
        %v683 = vpow.pop %v682
        %v684 = vadd.f32 %v681, 1.0
        %v685 = vadd.f32 %v683, 1.0
        %v686 = vrcp.pop %v684
        %v687 = vmul.f32 1.0, %v686
        %v688 = vrcp.pop %v685
        %v689 = vmul.f32 1.0, %v688
        %v692 = vcombine.low %v687, %v689
        %694 = vst [vmem:[%s254] sm:$0x77] %v692
        %s695 = smul.u32 2, %s24
        %p696 = scmp.lt.s32.totalorder %s23, 1
        %s697 = scalar_select %p696, %s23, 1
        %p698 = scmp.lt.s32.totalorder %s695, 1
        %s699 = scalar_select %p698, %s695, 1
        %s700 = smul.addr %s697, 2
        %s701 = sadd.s32 %s699, %s700
        %s702 = smul.addr %s701, 4
        %s703 = scalar_lea.vmem %s2, %s702
        %s704 = smul.u32 2, %s24
        %p705 = scmp.lt.s32.totalorder %s23, 1
        %s706 = scalar_select %p705, %s23, 1
        %p707 = scmp.lt.s32.totalorder %s704, 1
        %s708 = scalar_select %p707, %s704, 1
        %s709 = smul.addr %s706, 2
        %s710 = sadd.s32 %s708, %s709
        %s711 = smul.addr %s710, 4
        %s712 = scalar_lea.vmem %s3, %s711
        // Predicated region
        $region37: #{tpu_custom_call.1} parent=27 // pred_check
          %p713 = pneg %p100
        $region38: #{tpu_custom_call.1} parent=27 // pred_check_branch
          %715 = sbr.rel (%p713) target = $region40
        $region39: #{tpu_custom_call.1} parent=27 // pred_region
          %s716 = smul.u32 2, %s24
        $region40: #{tpu_custom_call.1} parent=27 // pred_fallthru
          _
        // Predicated region
        $region41: #{tpu_custom_call.1} parent=27 // pred_check
          %p717 = pneg %p128
        $region42: #{tpu_custom_call.1} parent=27 // pred_check_branch
          %719 = sbr.rel (%p717) target = $region44
        $region43: #{tpu_custom_call.1} parent=27 // pred_region
          %s720 = smul.u32 2, %s24
        $region44: #{tpu_custom_call.1} parent=27 // pred_fallthru
          _
      $region28: #{tpu_custom_call.1} parent=5 // pred_fallthru
        _
      %p721 = scmp.le.s32.totalorder 2, %s14
      // Predicated region
      $region45: #{tpu_custom_call.1} parent=5 // pred_check
        %p722 = pneg %p721
      $region46: #{tpu_custom_call.1} parent=5 // pred_check_branch
        %724 = sbr.rel (%p722) target = $region48
      $region47: #{tpu_custom_call.1} parent=5 // pred_region
        %s725 = ssub.s32 %s14, 2
        // Predicated region
        $region49: #{tpu_custom_call.1} parent=47 // pred_check
          %p726 = pneg %p106
        $region50: #{tpu_custom_call.1} parent=47 // pred_check_branch
          %728 = sbr.rel (%p726) target = $region52
        $region51: #{tpu_custom_call.1} parent=47 // pred_region
          %s729 = smul.u32 2, %s26
          %p730 = scmp.lt.s32.totalorder %s25, 1
          %s731 = scalar_select %p730, %s25, 1
          %p732 = scmp.lt.s32.totalorder %s729, 1
          %s733 = scalar_select %p732, %s729, 1
          %s734 = smul.addr %s731, 2
          %s735 = sadd.s32 %s733, %s734
          %s736 = smul.addr %s735, 4
          %s737 = scalar_lea.vmem %s2, %s736
        $region52: #{tpu_custom_call.1} parent=47 // pred_fallthru
          _
        // Predicated region
        $region53: #{tpu_custom_call.1} parent=47 // pred_check
          %p738 = pneg %p134
        $region54: #{tpu_custom_call.1} parent=47 // pred_check_branch
          %740 = sbr.rel (%p738) target = $region56
        $region55: #{tpu_custom_call.1} parent=47 // pred_region
          %s741 = smul.u32 2, %s26
          %p742 = scmp.lt.s32.totalorder %s25, 1
          %s743 = scalar_select %p742, %s25, 1
          %p744 = scmp.lt.s32.totalorder %s741, 1
          %s745 = scalar_select %p744, %s741, 1
          %s746 = smul.addr %s743, 2
          %s747 = sadd.s32 %s745, %s746
          %s748 = smul.addr %s747, 4
          %s749 = scalar_lea.vmem %s3, %s748
        $region56: #{tpu_custom_call.1} parent=47 // pred_fallthru
          _
      $region48: #{tpu_custom_call.1} parent=5 // pred_fallthru
        _
    $region6: #{tpu_custom_call.1} parent=1 // loop_footer
      %s18 = sadd.s32 1, %s14
    $region7: #{tpu_custom_call.1} parent=1 // loop_footer_branch
      %13 = sbr.rel target = $region3
    $region8: #{tpu_custom_call.1} parent=1 // loop_exit
      _
    %750 = vsyncpa [#allocation3], 1
    %s751 = scalar_lea.sflag [#allocation3], 1
    %752 = vsyncpa %s751, 1
    %753 = vsyncpa [#allocation5], 1

</llo_original>
